<compile_context>
chip_gen: v6e
topology: v6e:2x2x1
jax: 0.10.0
libtpu: 0.0.40
codegen_flags: <defaults>
</compile_context>

<pallas_src>
import functools

import jax
import jax.numpy as jnp
from jax.experimental import pallas as pl
from jax.experimental.pallas import tpu as pltpu

_HALO = 128                      # one lane-group of left context across T tiles
_TILE_BYTES = 4 << 20            # ~4 MiB per tile (roofline plateau, VMEM-safe)
_VMEM_LIMIT = 48 << 20           # explicit scoped-VMEM budget (fits v7x's 64 MiB)


def _round_up(n, m):
    return ((n + m - 1) // m) * m


def _round_down(n, m):
    return (n // m) * m


def _preemphasis_full_rows_kernel(x_ref, o_ref, *, coef):
    """One (tile_rows, T) block of full rows: no halo needed."""
    x = x_ref[...]
    prev = pltpu.roll(x, shift=1, axis=1)          # prev[:, 0] is garbage (x[:, -1])
    o_ref[...] = (x - coef * prev).astype(o_ref.dtype)
    # Narrow (1-lane) reflect-pad fixup: y[:, 0] = x[:, 0] - coef * x[:, 1].
    o_ref[:, 0:1] = (x[:, 0:1] - coef * x[:, 1:2]).astype(o_ref.dtype)


def _preemphasis_tiled_t_kernel(x_ref, left_ref, o_ref, *, coef):
    """(tile_rows, tile_t) block; left_ref holds the 128 samples preceding it."""
    j = pl.program_id(1)
    x = x_ref[...]
    prev = pltpu.roll(x, shift=1, axis=1)          # prev[:, 0] is garbage
    o_ref[...] = (x - coef * prev).astype(o_ref.dtype)
    # Narrow column-0 fixup: reflect value x[:, 1] for the first T tile, otherwise
    # the last sample of the previous T tile (from the tiny halo block).
    left = jnp.where(j == 0, x[:, 1:2], left_ref[:, _HALO - 1:_HALO])
    o_ref[:, 0:1] = (x[:, 0:1] - coef * left).astype(o_ref.dtype)


def _choose_tiles(B, T, dtype):
    """Pick (tile_rows, tile_t): ~4 MiB tiles, sublane-packed rows, lane-dense T."""
    itemsize = jnp.dtype(dtype).itemsize
    packing = max(8, 32 // itemsize)               # 8 f32, 16 bf16, 32 int8/fp8
    tile_elems = max(_TILE_BYTES // itemsize, packing * 128)

    # Rows per tile: a multiple of the sublane packing, capped at ~half the batch
    # so megacore / both v7x TensorCores see at least two row blocks when B allows.
    if B <= packing:
        tile_rows = B
    else:
        rows = max(packing, _round_down(tile_elems // max(T, 1), packing))
        rows = min(rows, _round_up((B + 1) // 2, packing))
        tile_rows = B if rows >= B else rows

    # T per tile: full rows when they fit the byte budget, else a large multiple
    # of 128 (the halo path supplies x[t-1] across T-tile boundaries).
    if tile_rows * T <= tile_elems:
        tile_t = T
    else:
        tile_t = max(_HALO, _round_down(tile_elems // tile_rows, 128))
        if tile_t >= T:
            tile_t = T
    return tile_rows, tile_t


@functools.partial(jax.jit, static_argnames=("coef", "tile_rows", "tile_t"))
def preemphasis(x, *, coef=0.97, tile_rows=None, tile_t=None):
    """y[:, t] = x[:, t] - coef * x[:, t-1], reflect padding at t == 0. x: (B, T)."""
    B, T = x.shape
    assert T >= 2, "reflect padding requires at least 2 samples per row"

    tr, tt = _choose_tiles(B, T, x.dtype)
    if tile_rows is not None:
        tr = int(tile_rows)
    if tile_t is not None:
        tt = int(tile_t)

    rows_grid = pl.cdiv(B, tr)
    t_grid = pl.cdiv(T, tt)
    itemsize = jnp.dtype(x.dtype).itemsize
    cost = pl.CostEstimate(flops=2 * B * T, transcendentals=0,
                           bytes_accessed=2 * B * T * itemsize)
    coef = float(coef)

    if t_grid == 1:
        # Rows fit the tile budget whole: 1-D row grid, lane-dense tiles, no halo.
        return pl.pallas_call(
            functools.partial(_preemphasis_full_rows_kernel, coef=coef),
            out_shape=jax.ShapeDtypeStruct((B, T), x.dtype),
            grid_spec=pltpu.PrefetchScalarGridSpec(
                num_scalar_prefetch=0,
                grid=(rows_grid,),
                in_specs=[pl.BlockSpec((tr, T), lambda i: (i, 0))],
                out_specs=pl.BlockSpec((tr, T), lambda i: (i, 0))),
            compiler_params=pltpu.CompilerParams(
                dimension_semantics=("parallel",),
                vmem_limit_bytes=_VMEM_LIMIT),
            cost_estimate=cost,
        )(x)

    # Long waveforms: tile T as well so VMEM stays bounded.  A tiny (tr, 128) halo
    # block of the same input supplies x[t-1] across T-tile boundaries.
    assert tt % _HALO == 0, "tile_t must be a multiple of 128 when tiling T"
    nh = tt // _HALO
    return pl.pallas_call(
        functools.partial(_preemphasis_tiled_t_kernel, coef=coef),
        out_shape=jax.ShapeDtypeStruct((B, T), x.dtype),
        grid_spec=pltpu.PrefetchScalarGridSpec(
            num_scalar_prefetch=0,
            grid=(rows_grid, t_grid),
            in_specs=[
                pl.BlockSpec((tr, tt), lambda i, j: (i, j)),
                pl.BlockSpec((tr, _HALO),
                             lambda i, j: (i, jnp.maximum(j * nh - 1, 0))),
            ],
            out_specs=pl.BlockSpec((tr, tt), lambda i, j: (i, j))),
        compiler_params=pltpu.CompilerParams(
            dimension_semantics=("parallel", "parallel"),
            vmem_limit_bytes=_VMEM_LIMIT),
        cost_estimate=cost,
    )(x, x)


def _reference(x, coef=0.97):
    prev = jnp.concatenate([x[:, 1:2], x[:, :-1]], axis=-1)
    return (x - coef * prev).astype(x.dtype)


if __name__ == "__main__":
    coef = 0.97

    # 1) Small f32 batch (single full-row T block): exact match vs the conv1d math.
    x1 = jax.random.normal(jax.random.PRNGKey(0), (2, 1024), dtype=jnp.float32)
    y1 = jax.block_until_ready(preemphasis(x1, coef=coef))
    assert y1.shape == x1.shape and y1.dtype == x1.dtype
    assert jnp.allclose(y1, _reference(x1, coef), atol=1e-5, rtol=1e-5), \
        "mismatch vs reference (full-row path)"

    # 2) T-tiled halo path with ragged batch AND ragged T (partial edge blocks are
    #    masked by Pallas -- no pad/slice HBM passes).
    x2 = jax.random.normal(jax.random.PRNGKey(1), (10, 1000), dtype=jnp.float32)
    y2 = jax.block_until_ready(preemphasis(x2, coef=coef, tile_rows=8, tile_t=256))
    assert jnp.allclose(y2, _reference(x2, coef), atol=1e-5, rtol=1e-5), \
        "mismatch vs reference (T-tiled halo path)"

    # 3) bf16 waveforms (native bf16 compute path on v6e/v7x).
    x3 = jax.random.normal(jax.random.PRNGKey(2), (16, 512), dtype=jnp.bfloat16)
    y3 = jax.block_until_ready(preemphasis(x3, coef=coef))
    assert jnp.allclose(y3.astype(jnp.float32),
                        _reference(x3, coef).astype(jnp.float32),
                        atol=2e-2, rtol=2e-2), "mismatch vs reference (bf16 path)"

    print("KERNEL_OK")
</pallas_src>

<mosaic_0001>
module attributes {stable_mosaic.version = 11 : i64} {
  func.func @_preemphasis_full_rows_kernel(%arg0: i32, %arg1: memref<2x1024xf32, #tpu.memory_space<vmem>>, %arg2: memref<2x1024xf32, #tpu.memory_space<vmem>>) attributes {dimension_semantics = [#tpu.dimension_semantics<parallel>], iteration_bounds = array<i64: 1>, scalar_prefetch = 0 : i64, scratch_operands = 0 : i64, tpu.core_type = #tpu.core_type<tc>, window_params = [{transform_indices = @transform_0, window_bounds = array<i64: 2, 1024>}, {transform_indices = @transform_1, window_bounds = array<i64: 2, 1024>}]} {
    %c0 = arith.constant 0 : index
    %c0_0 = arith.constant 0 : index
    %0 = vector.load %arg1[%c0, %c0_0] : memref<2x1024xf32, #tpu.memory_space<vmem>>, vector<2x1024xf32>
    %c1_i32 = arith.constant 1 : i32
    %1 = tpu.dynamic_rotate %0 by %c1_i32 dim 1 : vector<2x1024xf32>, i32 -> vector<2x1024xf32>
    %cst = arith.constant 9.700000e-01 : f32
    %2 = vector.broadcast %cst : f32 to vector<2x1024xf32>
    %3 = arith.mulf %2, %1 : vector<2x1024xf32>
    %4 = arith.subf %0, %3 : vector<2x1024xf32>
    %c0_1 = arith.constant 0 : index
    %c0_2 = arith.constant 0 : index
    %5 = vector.load %arg2[%c0_1, %c0_2] : memref<2x1024xf32, #tpu.memory_space<vmem>>, vector<2x1024xf32>
    tpu.vector_store %arg2[%c0_1, %c0_2], %4 {strides = array<i32>} : memref<2x1024xf32, #tpu.memory_space<vmem>>, vector<2x1024xf32>,
    %6 = vector.extract_strided_slice %0 {offsets = [0, 0], sizes = [2, 1], strides = [1, 1]} : vector<2x1024xf32> to vector<2x1xf32>
    %7 = vector.extract_strided_slice %0 {offsets = [0, 1], sizes = [2, 1], strides = [1, 1]} : vector<2x1024xf32> to vector<2x1xf32>
    %cst_3 = arith.constant 9.700000e-01 : f32
    %8 = vector.broadcast %cst_3 : f32 to vector<2x1xf32>
    %9 = arith.mulf %8, %7 : vector<2x1xf32>
    %10 = arith.subf %6, %9 : vector<2x1xf32>
    %c0_4 = arith.constant 0 : index
    %c0_5 = arith.constant 0 : index
    %11 = vector.load %arg2[%c0_4, %c0_5] : memref<2x1024xf32, #tpu.memory_space<vmem>>, vector<2x1xf32>
    tpu.vector_store %arg2[%c0_4, %c0_5], %10 {strides = array<i32>} : memref<2x1024xf32, #tpu.memory_space<vmem>>, vector<2x1xf32>,
    return
  }
  func.func @transform_0(%arg0: i32) -> (i32, i32) {
    %c0_i32 = arith.constant 0 : i32
    %c0_i32_0 = arith.constant 0 : i32
    return %arg0, %c0_i32 : i32, i32
  }
  func.func @transform_1(%arg0: i32) -> (i32, i32) {
    %c0_i32 = arith.constant 0 : i32
    %c0_i32_0 = arith.constant 0 : i32
    return %arg0, %c0_i32 : i32, i32
  }
}

</mosaic_0001>

<llo_original>
// kernel: preemphasis.1
$region0: #{preemphasis.1}
  #allocation0 [shape = 'u32[]', space=smem, size = 0x4, offset = 0x4, fixed_abs, tag = 'smem constant byte address 0x4 - core index']
  #allocation1 [shape = 'u32[144,128]{1,0:T(1,128)}', space=vmem, size = 0x12000, scoped, tag = 'internal scratch']
  %s0 = inlined_call_operand.hbm [shape: f32[2,1024], index: 0, kind: input, shape index: {}]
  %s1 = inlined_call_operand.hbm [shape: f32[2,1024], index: 1, kind: output, shape index: {}]
  %s2 = sld [smem:[#allocation0]]
  $region18: #{preemphasis.1} parent=0
    _
  %s4 = ssub.s32 1, %s2
  %s5 = scalar_select 0, %s4, %s2
  $region1: #{preemphasis.1} parent=0
    #allocation2 [shape = 'u8[8192]{0}', space=vmem, size = 0x2000, scoped, tag = 'input window, operand 0, single buffered']
    #allocation3 [shape = 's32[1]{0}', space=sflag, size = 0x4, scoped, tag = 'scoped memory for preemphasis.1']
    #allocation4 [shape = 's32[1]{0}', space=sflag, size = 0x4, scoped, tag = 'scoped memory for preemphasis.1']
    #allocation5 [shape = 'u8[8192]{0}', space=vmem, size = 0x2000, scoped, tag = 'output window, operand 0, single buffered']
    %6 = vsyncpa [#allocation3], 0
    %7 = vsyncpa [#allocation4], 0
    // Predicated region
    $region2: #{preemphasis.1} parent=1 // pred_check
      _
    $region3: #{preemphasis.1} parent=1 // pred_check_branch
      %9 = sbr.rel (0) target = $region5
    $region4: #{preemphasis.1} parent=1 // pred_region
      %s11 = ssub.s32 256, 256
      %12 = vsyncadd [#allocation3], %s11
      %s14 = sshll.u32 [#allocation2], 4
      %s15 = int_to_ptr.vmem [resolvable:$true] %s14
      %17 = dma.hbm_to_vmem [thread:$0]  %s0, 256, %s15, [#allocation3]
    $region5: #{preemphasis.1} parent=1 // pred_fallthru
      _
    // Predicated region
    $region6: #{preemphasis.1} parent=1 // pred_check
      _
    $region7: #{preemphasis.1} parent=1 // pred_check_branch
      %19 = sbr.rel (0) target = $region9
    $region8: #{preemphasis.1} parent=1 // pred_region
      %20 = dma.done [#allocation3], 256
    $region9: #{preemphasis.1} parent=1 // pred_fallthru
      _
    %v21 = vld [vmem:[#allocation2] sm:$0xff]
    %v22 = vld [vmem:[#allocation2 + $0x8] sm:$0xff]
    %v25 = vcombine.high %v21, %v21
    %v27 = vunpack.c.l.s4 1983009808
    %v28 = vunpack.c.0.s8 %v27
    %v29 = vlaneseq
    %v30 = vshrl.u32 %v29, 7
    %v31 = vsub.s32 %v28, %v30
    %v32 = vrot.slane %v21, %v31
    %v34 = vunpack.c.l.s4 1983009808
    %v35 = vunpack.c.0.s8 %v34
    %v36 = vlaneseq
    %v37 = vshrl.u32 %v36, 7
    %v38 = vsub.s32 %v35, %v37
    %v39 = vrot.slane %v25, %v38
    %v40 = vcombine.high %v32, %v32
    %v41 = vcombine.high %v39, %v39
    %v42 = vcombine.high %v22, %v22
    %v44 = vunpack.c.l.s4 1983009808
    %v45 = vunpack.c.0.s8 %v44
    %v46 = vlaneseq
    %v47 = vshrl.u32 %v46, 7
    %v48 = vsub.s32 %v45, %v47
    %v49 = vrot.slane %v22, %v48
    %v51 = vunpack.c.l.s4 1983009808
    %v52 = vunpack.c.0.s8 %v51
    %v53 = vlaneseq
    %v54 = vshrl.u32 %v53, 7
    %v55 = vsub.s32 %v52, %v54
    %v56 = vrot.slane %v42, %v55
    %v57 = vcombine.high %v49, %v49
    %v58 = vcombine.high %v56, %v56
    %67 = vrot.lane.b32.xlu0 %v32, 1
    %v68 = vpop.permute.xlu0 %67
    %69 = vrot.lane.b32.xlu0 %v40, 1
    %v70 = vpop.permute.xlu0 %69
    %71 = vrot.lane.b32.xlu0 %v39, 1
    %v72 = vpop.permute.xlu0 %71
    %73 = vrot.lane.b32.xlu0 %v41, 1
    %v74 = vpop.permute.xlu0 %73
    %75 = vrot.lane.b32.xlu0 %v49, 1
    %v76 = vpop.permute.xlu0 %75
    %77 = vrot.lane.b32.xlu0 %v57, 1
    %v78 = vpop.permute.xlu0 %77
    %79 = vrot.lane.b32.xlu0 %v56, 1
    %v80 = vpop.permute.xlu0 %79
    %81 = vrot.lane.b32.xlu0 %v58, 1
    %v82 = vpop.permute.xlu0 %81
    %v83 = vlaneseq
    %v84 = vand.u32 %v83, 127
    %vm85 = vcmp.lt.s32.totalorder %v84, 1
    %v86 = vsel %vm85, %v80, %v82
    %v87 = vsel %vm85, %v78, %v80
    %v88 = vsel %vm85, %v76, %v78
    %v89 = vsel %vm85, %v74, %v76
    %v90 = vsel %vm85, %v72, %v74
    %v91 = vsel %vm85, %v70, %v72
    %v92 = vsel %vm85, %v68, %v70
    %v93 = vsel %vm85, %v82, %v68
    %v94 = vmul.f32 %v93, 0.97
    %v95 = vmul.f32 %v92, 0.97
    %v96 = vmul.f32 %v91, 0.97
    %v97 = vmul.f32 %v90, 0.97
    %v98 = vmul.f32 %v89, 0.97
    %v99 = vmul.f32 %v88, 0.97
    %v100 = vmul.f32 %v87, 0.97
    %v101 = vmul.f32 %v86, 0.97
    %v110 = vcombine.low %v94, %v95
    %v111 = vcombine.low %v96, %v97
    %v113 = vunpack.c.l.s4 1983009808
    %v114 = vunpack.c.0.s8 %v113
    %v115 = vlaneseq
    %v116 = vshrl.u32 %v115, 7
    %v117 = vsub.s32 %v114, %v116
    %v118 = vrot.slane %v110, %v117
    %v120 = vunpack.c.l.s4 1983009808
    %v121 = vunpack.c.0.s8 %v120
    %v122 = vlaneseq
    %v123 = vshrl.u32 %v122, 7
    %v124 = vsub.s32 %v121, %v123
    %v125 = vrot.slane %v111, %v124
    %v126 = vcombine.low %v118, %v125
    %v127 = vcombine.low %v98, %v99
    %v128 = vcombine.low %v100, %v101
    %v130 = vunpack.c.l.s4 1983009808
    %v131 = vunpack.c.0.s8 %v130
    %v132 = vlaneseq
    %v133 = vshrl.u32 %v132, 7
    %v134 = vsub.s32 %v131, %v133
    %v135 = vrot.slane %v127, %v134
    %v137 = vunpack.c.l.s4 1983009808
    %v138 = vunpack.c.0.s8 %v137
    %v139 = vlaneseq
    %v140 = vshrl.u32 %v139, 7
    %v141 = vsub.s32 %v138, %v140
    %v142 = vrot.slane %v128, %v141
    %v143 = vcombine.low %v135, %v142
    %v146 = vsub.f32 %v21, %v126
    %v147 = vsub.f32 %v22, %v143
    %148 = vst [vmem:[#allocation5] sm:$0xff] %v146
    %149 = vst [vmem:[#allocation5 + $0x8] sm:$0xff] %v147
    %v150 = vmul.f32 %v21, 0.97
    %152 = vrot.lane.b32.xlu0 %v150, 127
    %v153 = vpop.permute.xlu0 %152
    %v155 = vsub.f32 %v21, %v153
    %vm156 = vcmask 1024
    %157 = vst.msk [vmem:[#allocation5] sm:$0x3] %vm156, %v155
    // Predicated region
    $region10: #{preemphasis.1} parent=1 // pred_check
      _
    $region11: #{preemphasis.1} parent=1 // pred_check_branch
      %159 = sbr.rel (0) target = $region13
    $region12: #{preemphasis.1} parent=1 // pred_region
      %s161 = ssub.s32 256, 256
      %162 = vsyncadd [#allocation4], %s161
      %s164 = sshll.u32 [#allocation5], 4
      %s165 = int_to_ptr.vmem [resolvable:$true] %s164
      %167 = dma.vmem_to_hbm [thread:$0]  %s165, 256, %s1, [#allocation4]
    $region13: #{preemphasis.1} parent=1 // pred_fallthru
      _
    // Predicated region
    $region14: #{preemphasis.1} parent=1 // pred_check
      _
    $region15: #{preemphasis.1} parent=1 // pred_check_branch
      %169 = sbr.rel (0) target = $region17
    $region16: #{preemphasis.1} parent=1 // pred_region
      %170 = dma.done [#allocation4], 256
    $region17: #{preemphasis.1} parent=1 // pred_fallthru
      _
    %171 = vsyncpa [#allocation3], 1
    %172 = vsyncpa [#allocation4], 1

</llo_original>
